<compile_context>
chip_gen: v5e
topology: v5e:2x2
jax: 0.10.0
libtpu: 0.0.40
codegen_flags: <defaults>
</compile_context>

<pallas_src>
import jax
import jax.numpy as jnp
from jax.experimental import pallas as pl
from jax.experimental.pallas import tpu as pltpu


def _gather_tokens_kernel(idx_ref, x_ref, o_ref):
    """o[t, :] = x[idx[t], :] via a one-hot matmul on the MXU.

    idx_ref : VMEM (1, T, 1) int32 — this batch's source-row table
    x_ref   : VMEM (1, N, dT)      — this batch's full token slab (D tile j)
    o_ref   : VMEM (1, T, dT)      — gathered output block
    """
    idx = idx_ref[0]                                     # (T, 1) int32
    t = idx.shape[0]
    n = x_ref.shape[1]
    col = jax.lax.broadcasted_iota(jnp.int32, (t, n), 1)
    onehot = (col == idx).astype(x_ref.dtype)            # (T, N), exactly 0/1
    o_ref[0] = jnp.dot(
        onehot, x_ref[0], preferred_element_type=jnp.float32
    ).astype(o_ref.dtype)


def gather_tokens(x, src_idx):
    """out[b, t, :] = x[b, src_idx[b, t], :]  (batched row gather)."""
    B, N, D = x.shape
    T = src_idx.shape[1]
    src_idx = src_idx.astype(jnp.int32).reshape(B, T, 1)

    # D tiling: keeps per-step VMEM bounded for wide models while keeping the
    # output store lane-dense.  For D not a multiple of 128 (or small D) take
    # the full row in one block (block shape then equals the full array dims).
    if D % 128 == 0 and D > 512:
        d_tile = max(c for c in range(128, 513, 128) if D % c == 0)
    else:
        d_tile = D
    grid = (B, D // d_tile)

    itemsize = x.dtype.itemsize
    # Double-buffered input slab + output block, lane-padded idx block, f32
    # intermediates (one-hot + accumulator); x2 slack, clamped to a value that
    # is safe on every generation (v5e/v6e/v7x).
    est = 2 * (N * d_tile + T * d_tile) * itemsize
    est += 2 * T * 128 * 4
    est += 2 * T * max(N, 128) * 4
    vmem_limit = int(min(max(2 * est, 8 << 20), 32 << 20))

    return pl.pallas_call(
        _gather_tokens_kernel,
        out_shape=jax.ShapeDtypeStruct((B, T, D), x.dtype),
        grid_spec=pltpu.PrefetchScalarGridSpec(
            num_scalar_prefetch=0,
            grid=grid,
            in_specs=[
                pl.BlockSpec((1, T, 1), lambda b, j: (b, 0, 0)),
                pl.BlockSpec((1, N, d_tile), lambda b, j: (b, 0, j)),
            ],
            out_specs=pl.BlockSpec((1, T, d_tile), lambda b, j: (b, 0, j)),
        ),
        compiler_params=pltpu.CompilerParams(
            dimension_semantics=("parallel", "parallel"),
            vmem_limit_bytes=vmem_limit),
        cost_estimate=pl.CostEstimate(
            flops=2 * B * T * N * D,
            transcendentals=0,
            bytes_accessed=(B * N * D + B * T * D) * itemsize + B * T * 4),
    )(src_idx, x)


class PatchDropout:
    """JAX / Pallas port of the PyTorch PatchDropout module."""

    def __init__(self, prob, exclude_first_token=True):
        assert 0 <= prob < 1.0
        self.prob = prob
        self.exclude_first_token = exclude_first_token

    def __call__(self, x, *, key, training=True):
        if (not training) or self.prob == 0.0:
            return x

        B, N, D = x.shape
        num_tokens = N - 1 if self.exclude_first_token else N
        keep_prob = 1.0 - self.prob
        num_keep = max(1, int(num_tokens * keep_prob))

        # randn + topk (descending) -> kept patch indices per batch.  top_k's
        # descending-value index order matches the PyTorch semantics; do not
        # sort the indices.
        rand = jax.random.normal(key, (B, num_tokens), dtype=jnp.float32)
        _, keep_idx = jax.lax.top_k(rand, num_keep)          # (B, num_keep)
        keep_idx = keep_idx.astype(jnp.int32)

        if self.exclude_first_token:
            # Fold the CLS token into the gather table (row 0 of every batch)
            # instead of a wrapper-side concat over the gathered output.
            src_tok = jnp.concatenate(
                [jnp.zeros((B, 1), jnp.int32), keep_idx + 1], axis=1)
        else:
            src_tok = keep_idx

        return gather_tokens(x, src_tok)


def patch_dropout_reference(x, prob, exclude_first_token, key):
    """Pure-JAX reference mirroring the PyTorch forward semantics."""
    B, N, D = x.shape
    if exclude_first_token:
        cls_tokens, xx = x[:, :1], x[:, 1:]
    else:
        xx = x
    num_tokens = xx.shape[1]
    num_keep = max(1, int(num_tokens * (1.0 - prob)))
    rand = jax.random.normal(key, (B, num_tokens), dtype=jnp.float32)
    _, idx = jax.lax.top_k(rand, num_keep)
    gathered = jnp.take_along_axis(xx, idx[..., None], axis=1)
    if exclude_first_token:
        gathered = jnp.concatenate([cls_tokens, gathered], axis=1)
    return gathered


if __name__ == "__main__":
    key = jax.random.PRNGKey(0)
    kx, kdrop, kx2, kdrop2 = jax.random.split(key, 4)

    # 1 CLS token + 16 patch tokens, hidden dim 32.
    B, N, D = 2, 17, 32
    x = jax.random.normal(kx, (B, N, D), dtype=jnp.float32)

    mod = PatchDropout(prob=0.5, exclude_first_token=True)
    out = jax.block_until_ready(mod(x, key=kdrop, training=True))
    ref = patch_dropout_reference(x, 0.5, True, kdrop)
    assert out.shape == ref.shape, (out.shape, ref.shape)
    assert jnp.allclose(out, ref), "Pallas gather mismatch vs reference"

    # Second config: lane-dense D, exclude_first_token=False branch.
    B2, N2, D2 = 2, 9, 128
    x2 = jax.random.normal(kx2, (B2, N2, D2), dtype=jnp.float32)
    mod2 = PatchDropout(prob=0.25, exclude_first_token=False)
    out2 = jax.block_until_ready(mod2(x2, key=kdrop2, training=True))
    ref2 = patch_dropout_reference(x2, 0.25, False, kdrop2)
    assert out2.shape == ref2.shape, (out2.shape, ref2.shape)
    assert jnp.allclose(out2, ref2), "Pallas gather mismatch vs reference (cfg 2)"

    # eval mode / prob=0 path is an identity passthrough.
    out_eval = mod(x, key=kdrop, training=False)
    assert jnp.allclose(out_eval, x)

    print("KERNEL_OK")
</pallas_src>

<mosaic_0001>
module attributes {stable_mosaic.version = 11 : i64} {
  func.func @_gather_tokens_kernel(%arg0: i32, %arg1: i32, %arg2: memref<1x9x1xi32, #tpu.memory_space<vmem>>, %arg3: memref<1x17x32xf32, #tpu.memory_space<vmem>>, %arg4: memref<1x9x32xf32, #tpu.memory_space<vmem>>) attributes {dimension_semantics = [#tpu.dimension_semantics<parallel>, #tpu.dimension_semantics<parallel>], iteration_bounds = array<i64: 2, 1>, scalar_prefetch = 0 : i64, scratch_operands = 0 : i64, tpu.core_type = #tpu.core_type<tc>, window_params = [{transform_indices = @transform_0, window_bounds = array<i64: 1, 9, 1>}, {transform_indices = @transform_1, window_bounds = array<i64: 1, 17, 32>}, {transform_indices = @transform_2, window_bounds = array<i64: 1, 9, 32>}]} {
    %c0 = arith.constant 0 : index
    %c0_0 = arith.constant 0 : index
    %c0_1 = arith.constant 0 : index
    %0 = vector.load %arg2[%c0, %c0_0, %c0_1] : memref<1x9x1xi32, #tpu.memory_space<vmem>>, vector<1x9x1xi32>
    %1 = vector.shape_cast %0 : vector<1x9x1xi32> to vector<9x1xi32>
    %2 = tpu.iota {dimensions = array<i32: 1>} : vector<9x17xi32>
    %3 = vector.broadcast %1 : vector<9x1xi32> to vector<9x17xi32>
    %4 = arith.cmpi eq, %2, %3 : vector<9x17xi32>
    %5 = arith.extui %4 : vector<9x17xi1> to vector<9x17xi32>
    %6 = arith.sitofp %5 : vector<9x17xi32> to vector<9x17xf32>
    %c0_2 = arith.constant 0 : index
    %c0_3 = arith.constant 0 : index
    %c0_4 = arith.constant 0 : index
    %7 = vector.load %arg3[%c0_2, %c0_3, %c0_4] : memref<1x17x32xf32, #tpu.memory_space<vmem>>, vector<1x17x32xf32>
    %8 = vector.shape_cast %7 : vector<1x17x32xf32> to vector<17x32xf32>
    %cst = arith.constant dense<0.000000e+00> : vector<9x32xf32>
    %9 = tpu.matmul %6, %8, %cst {dimension_numbers = #tpu.dot_dimension_numbers<[1], [0], [0], [1], [0, 0, 1, 1], [], []>} : vector<9x17xf32>, vector<17x32xf32>, vector<9x32xf32> -> vector<9x32xf32>
    %c0_5 = arith.constant 0 : index
    %c0_6 = arith.constant 0 : index
    %c0_7 = arith.constant 0 : index
    %10 = vector.load %arg4[%c0_5, %c0_6, %c0_7] : memref<1x9x32xf32, #tpu.memory_space<vmem>>, vector<1x9x32xf32>
    %11 = vector.shape_cast %10 : vector<1x9x32xf32> to vector<9x32xf32>
    %12 = vector.shape_cast %9 : vector<9x32xf32> to vector<1x9x32xf32>
    tpu.vector_store %arg4[%c0_5, %c0_6, %c0_7], %12 {strides = array<i32>} : memref<1x9x32xf32, #tpu.memory_space<vmem>>, vector<1x9x32xf32>,
    return
  }
  func.func @transform_0(%arg0: i32, %arg1: i32) -> (i32, i32, i32) {
    %c0_i32 = arith.constant 0 : i32
    %c0_i32_0 = arith.constant 0 : i32
    %c0_i32_1 = arith.constant 0 : i32
    return %arg0, %c0_i32, %c0_i32_0 : i32, i32, i32
  }
  func.func @transform_1(%arg0: i32, %arg1: i32) -> (i32, i32, i32) {
    %c0_i32 = arith.constant 0 : i32
    %c0_i32_0 = arith.constant 0 : i32
    return %arg0, %c0_i32, %arg1 : i32, i32, i32
  }
  func.func @transform_2(%arg0: i32, %arg1: i32) -> (i32, i32, i32) {
    %c0_i32 = arith.constant 0 : i32
    %c0_i32_0 = arith.constant 0 : i32
    return %arg0, %c0_i32, %arg1 : i32, i32, i32
  }
}

</mosaic_0001>

<llo_original>
// kernel: tpu_custom_call.1
$region0: #{tpu_custom_call.1}
  #allocation0 [shape = 'u32[]', space=smem, size = 0x4, offset = 0x4, fixed_abs, tag = 'smem constant byte address 0x4 - core index']
  #allocation1 [shape = 'u32[72,128]{1,0:T(1,128)}', space=vmem, size = 0x9000, scoped, tag = 'internal scratch']
  %s0 = inlined_call_operand.vmem [shape: s32[2,9,1], index: 0, kind: input, shape index: {}]
  %s1 = inlined_call_operand.vmem [shape: f32[2,17,32], index: 1, kind: input, shape index: {}]
  %s2 = inlined_call_operand.vmem [shape: f32[2,9,32], index: 2, kind: output, shape index: {}]
  %s3 = sld [smem:[#allocation0]]
  $region41: #{tpu_custom_call.1} parent=0
    _
  %s5 = ssub.s32 1, %s3
  %s6 = scalar_select 0, %s5, %s3
  loop: start=0, step=1, limit=4
  $region2: #{tpu_custom_call.1} parent=0 // loop_pre_header
    _
  $region3: #{tpu_custom_call.1} parent=0 // loop_header
    %s8 = sphi 0, %s12
    %p9 = scmp.ge.s32.totalorder %s8, 4
    %s15 = sphi 0, %s27
    %s16 = sphi 0, %s23
    %s17 = sphi 0, %s15
    %s18 = sphi 0, %s16
    %s19 = sphi 0, %s17
    %s20 = sphi 0, %s18
    %s30 = sphi 0, %s32
    %s33 = sphi 0, %s30
    %s34 = sphi 0, %s33
    %s50 = sphi 0, %s34
    %s58 = sphi 0, %s60
    %s61 = sphi 0, %s58
    %s62 = sphi 0, %s61
    %s78 = sphi 0, %s62
    %s86 = sphi 0, %s88
    %s89 = sphi 0, %s86
    %s90 = sphi 0, %s89
    %s106 = sphi 0, %s90
  $region4: #{tpu_custom_call.1} parent=0 // loop_header_branch
    %11 = sbr.rel (%p9) target = $region8
  $region5: #{tpu_custom_call.1} parent=0 // loop_body
    %s13 = ssub.s32 %s8, 1
    %s14 = ssub.s32 %s8, 2
    %s21 = sadd.s32 1, %s16
    %p22 = scmp.ge.s32.totalorder %s21, 1
    %s23 = scalar_select %p22, 0, %s21
    %s24 = sadd.s32 1, %s15
    %s25 = scalar_select %p22, %s24, %s15
    %p26 = scmp.ge.s32.totalorder %s25, 2
    %s27 = scalar_select %p26, 0, %s25
    %s28 = ssub.s32 %s15, %s27
    %p29 = scmp.eq.s32.totalorder %s28, 0
    %s31 = sadd.s32 %s30, 1
    %s32 = scalar_select %p29, %s30, %s31
    %p35 = pneg %p29
    %p36 = scmp.eq.s32.totalorder %s8, 1
    %p37 = por %p35, %p36
    %p38 = scmp.ne.s32.totalorder %s30, %s33
    %p39 = scmp.eq.s32.totalorder %s8, 0
    %p40 = por %p38, %p39
    %p41 = scmp.ne.s32.totalorder %s30, %s33
    %p42 = scmp.eq.s32.totalorder %s13, 1
    %p43 = por %p41, %p42
    %p44 = scmp.ne.s32.totalorder %s33, %s34
    %p45 = scmp.eq.s32.totalorder %s13, 0
    %p46 = por %p44, %p45
    %p47 = scmp.ne.s32.totalorder %s33, %s34
    %p48 = scmp.eq.s32.totalorder %s14, 1
    %p49 = por %p47, %p48
    %p51 = scmp.ne.s32.totalorder %s34, %s50
    %p52 = scmp.eq.s32.totalorder %s14, 0
    %p53 = por %p51, %p52
    %s54 = ssub.s32 %s15, %s27
    %s55 = ssub.s32 %s16, %s23
    %s56 = sor.u32 %s54, %s55
    %p57 = scmp.eq.s32.totalorder %s56, 0
    %s59 = sadd.s32 %s58, 1
    %s60 = scalar_select %p57, %s58, %s59
    %p63 = pneg %p57
    %p64 = scmp.eq.s32.totalorder %s8, 1
    %p65 = por %p63, %p64
    %p66 = scmp.ne.s32.totalorder %s58, %s61
    %p67 = scmp.eq.s32.totalorder %s8, 0
    %p68 = por %p66, %p67
    %p69 = scmp.ne.s32.totalorder %s58, %s61
    %p70 = scmp.eq.s32.totalorder %s13, 1
    %p71 = por %p69, %p70
    %p72 = scmp.ne.s32.totalorder %s61, %s62
    %p73 = scmp.eq.s32.totalorder %s13, 0
    %p74 = por %p72, %p73
    %p75 = scmp.ne.s32.totalorder %s61, %s62
    %p76 = scmp.eq.s32.totalorder %s14, 1
    %p77 = por %p75, %p76
    %p79 = scmp.ne.s32.totalorder %s62, %s78
    %p80 = scmp.eq.s32.totalorder %s14, 0
    %p81 = por %p79, %p80
    %s82 = ssub.s32 %s15, %s27
    %s83 = ssub.s32 %s16, %s23
    %s84 = sor.u32 %s82, %s83
    %p85 = scmp.eq.s32.totalorder %s84, 0
    %s87 = sadd.s32 %s86, 1
    %s88 = scalar_select %p85, %s86, %s87
    %p91 = pneg %p85
    %p92 = scmp.eq.s32.totalorder %s8, 1
    %p93 = por %p91, %p92
    %p94 = scmp.ne.s32.totalorder %s86, %s89
    %p95 = scmp.eq.s32.totalorder %s8, 0
    %p96 = por %p94, %p95
    %p97 = scmp.ne.s32.totalorder %s86, %s89
    %p98 = scmp.eq.s32.totalorder %s13, 1
    %p99 = por %p97, %p98
    %p100 = scmp.ne.s32.totalorder %s89, %s90
    %p101 = scmp.eq.s32.totalorder %s13, 0
    %p102 = por %p100, %p101
    %p103 = scmp.ne.s32.totalorder %s89, %s90
    %p104 = scmp.eq.s32.totalorder %s14, 1
    %p105 = por %p103, %p104
    %p107 = scmp.ne.s32.totalorder %s90, %s106
    %p108 = scmp.eq.s32.totalorder %s14, 0
    %p109 = por %p107, %p108
    %p110 = scmp.le.s32.totalorder 1, %s8
    %p111 = scmp.lt.s32.totalorder %s8, 3
    %p112 = pnand %p110, %p111
    %p113 = pneg %p112
    // Predicated region
    $region9: #{tpu_custom_call.1} parent=5 // pred_check
      _
    $region10: #{tpu_custom_call.1} parent=5 // pred_check_branch
      %115 = sbr.rel (%p112) target = $region12
    $region11: #{tpu_custom_call.1} parent=5 // pred_region
      %s116 = ssub.s32 %s8, 1
    $region12: #{tpu_custom_call.1} parent=5 // pred_fallthru
      _
    %p117 = scmp.lt.s32.totalorder %s8, 2
    // Predicated region
    $region13: #{tpu_custom_call.1} parent=5 // pred_check
      %p118 = pneg %p117
    $region14: #{tpu_custom_call.1} parent=5 // pred_check_branch
      %120 = sbr.rel (%p118) target = $region16
    $region15: #{tpu_custom_call.1} parent=5 // pred_region
      // Predicated region
      $region17: #{tpu_custom_call.1} parent=15 // pred_check
        %p121 = pneg %p40
      $region18: #{tpu_custom_call.1} parent=15 // pred_check_branch
        %123 = sbr.rel (%p121) target = $region20
      $region19: #{tpu_custom_call.1} parent=15 // pred_region
        %p124 = scmp.lt.s32.totalorder %s15, 1
        %s125 = scalar_select %p124, %s15, 1
        %s126 = smul.addr %s125, 2
        %s127 = smul.addr %s126, 8
        %s128 = scalar_lea.vmem %s0, %s127
      $region20: #{tpu_custom_call.1} parent=15 // pred_fallthru
        _
      // Predicated region
      $region21: #{tpu_custom_call.1} parent=15 // pred_check
        %p129 = pneg %p68
      $region22: #{tpu_custom_call.1} parent=15 // pred_check_branch
        %131 = sbr.rel (%p129) target = $region24
      $region23: #{tpu_custom_call.1} parent=15 // pred_region
        %p132 = scmp.lt.s32.totalorder %s15, 1
        %s133 = scalar_select %p132, %s15, 1
        %p134 = scmp.lt.s32.totalorder %s16, 0
        %s135 = scalar_select %p134, %s16, 0
        %s136 = smul.addr %s133, 3
        %s137 = sadd.s32 %s135, %s136
        %s138 = smul.addr %s137, 8
        %s139 = scalar_lea.vmem %s1, %s138
      $region24: #{tpu_custom_call.1} parent=15 // pred_fallthru
        _
    $region16: #{tpu_custom_call.1} parent=5 // pred_fallthru
      _
    %p140 = scmp.le.s32.totalorder 1, %s8
    %p141 = scmp.lt.s32.totalorder %s8, 3
    %p142 = pnand %p140, %p141
    %p143 = pneg %p142
    // Predicated region
    $region25: #{tpu_custom_call.1} parent=5 // pred_check
      _
    $region26: #{tpu_custom_call.1} parent=5 // pred_check_branch
      %145 = sbr.rel (%p142) target = $region28
    $region27: #{tpu_custom_call.1} parent=5 // pred_region
      %s146 = ssub.s32 %s8, 1
      %p147 = scmp.lt.s32.totalorder %s17, 1
      %s148 = scalar_select %p147, %s17, 1
      %s149 = smul.addr %s148, 2
      %s150 = smul.addr %s149, 8
      %s151 = scalar_lea.vmem %s0, %s150
      %p152 = pneg %p46
      %p153 = pneg %p43
      %p154 = scmp.lt.s32.totalorder %s17, 1
      %s155 = scalar_select %p154, %s17, 1
      %p156 = scmp.lt.s32.totalorder %s18, 0
      %s157 = scalar_select %p156, %s18, 0
      %s158 = smul.addr %s155, 3
      %s159 = sadd.s32 %s157, %s158
      %s160 = smul.addr %s159, 8
      %s161 = scalar_lea.vmem %s1, %s160
      %p162 = pneg %p74
      %p163 = pneg %p71
      %p164 = pneg %p102
      %p165 = pneg %p99
      %p166 = scmp.lt.s32.totalorder %s17, 1
      %s167 = scalar_select %p166, %s17, 1
      %p168 = scmp.lt.s32.totalorder %s18, 0
      %s169 = scalar_select %p168, %s18, 0
      %s170 = smul.addr %s167, 2
      %s171 = sadd.s32 %s169, %s170
      %s172 = smul.addr %s171, 8
      %s173 = scalar_lea.vmem %s2, %s172
      %p174 = scmp.lt.s32.totalorder %s17, 1
      %s175 = scalar_select %p174, %s17, 1
      %s176 = smul.addr %s175, 2
      %s177 = smul.addr %s176, 8
      %s178 = scalar_lea.vmem %s0, %s177
      %p179 = scmp.lt.s32.totalorder %s17, 1
      %s180 = scalar_select %p179, %s17, 1
      %p181 = scmp.lt.s32.totalorder %s18, 0
      %s182 = scalar_select %p181, %s18, 0
      %s183 = smul.addr %s180, 3
      %s184 = sadd.s32 %s182, %s183
      %s185 = smul.addr %s184, 8
      %s186 = scalar_lea.vmem %s1, %s185
      %p187 = scmp.lt.s32.totalorder %s17, 1
      %s188 = scalar_select %p187, %s17, 1
      %p189 = scmp.lt.s32.totalorder %s18, 0
      %s190 = scalar_select %p189, %s18, 0
      %s191 = smul.addr %s188, 2
      %s192 = sadd.s32 %s190, %s191
      %s193 = smul.addr %s192, 8
      %s194 = scalar_lea.vmem %s2, %s193
      %v195 = vld [vmem:[%s178] sm:$0xff]
      %v196 = vld [vmem:[%s178 + $0x8] sm:$0x1]
      %v197 = vlaneseq
      %v198 = vand.u32 %v197, 127
      %199 = vset.pattern.permute.xlu0 0
      %200 = vperm.xlu0 %199, %v195
      %v201 = vpop.permute.xlu0 %200
      %202 = vset.pattern.permute.xlu0 0
      %203 = vperm.xlu0 %202, %v196
      %v204 = vpop.permute.xlu0 %203
      %vm205 = vcmp.eq.s32.totalorder %v198, %v201
      %vm206 = vcmp.eq.s32.totalorder %v198, %v204
      %v207 = vsel %vm205, 1, 0
      %v208 = vsel %vm206, 1, 0
      %v209 = vcvt.s32.f32 %v207
      %v210 = vcvt.s32.f32 %v208
      %v211 = vld [vmem:[%s186] sm:$0xff]
      %v212 = vld [vmem:[%s186 + $0x8] sm:$0xff]
      %v213 = vld [vmem:[%s186 + $0x10] sm:$0x1]
      %vm214 = vcmask 138240
      %v216 = vsel %vm214, %v209, 0
      %v219 = vsel %vm214, %v210, 0
      %vm221 = vcmask 1040384
      %v223 = vsel %vm221, %v213, 0
      %225 = vmatpush.msra.mxu0 0.0
      %226 = vmatpush.msra.mxu0 0.0
      %227 = vmatpush.msra.mxu0 0.0
      %228 = vmatpush.msra.mxu0 0.0
      %229 = vmatpush.msra.mxu0 0.0
      %230 = vmatpush.msra.mxu0 0.0
      %231 = vmatpush.msra.mxu0 0.0
      %232 = vmatpush.msra.mxu0 0.0
      %233 = vmatpush.msra.mxu0 0.0
      %234 = vmatpush.msra.mxu0 0.0
      %235 = vmatpush.msra.mxu0 0.0
      %236 = vmatpush.msra.mxu0 0.0
      %237 = vmatpush.msra.mxu0 0.0
      %238 = vmatpush.msra.mxu0 %v223
      %239 = vmatpush.msra.mxu0 %v212
      %240 = vmatpush.msra.mxu0 %v211
      %241 = vmatmul.f32.gmra.mxu0 %v216
      %v242 = vpop.f32.mrf.mxu0
      %v243 = vadd.f32 0.0, %v242
      %244 = vmatmul.f32.gmra.mxu0 %v219
      %v245 = vpop.f32.mrf.mxu0
      %v246 = vadd.f32 0.0, %v245
      %247 = vdwg.mxu0
      %vm248 = vcmask 261120
      %249 = vst.msk [vmem:[%s194] sm:$0xff] %vm248, %v243
      %vm250 = vcmask 253952
      %251 = vst.msk [vmem:[%s194 + $0x8] sm:$0x1] %vm250, %v246
      %p252 = scmp.lt.s32.totalorder %s17, 1
      %s253 = scalar_select %p252, %s17, 1
      %p254 = scmp.lt.s32.totalorder %s18, 0
      %s255 = scalar_select %p254, %s18, 0
      %s256 = smul.addr %s253, 2
      %s257 = sadd.s32 %s255, %s256
      %s258 = smul.addr %s257, 8
      %s259 = scalar_lea.vmem %s2, %s258
      // Predicated region
      $region29: #{tpu_custom_call.1} parent=27 // pred_check
        %p260 = pneg %p99
      $region30: #{tpu_custom_call.1} parent=27 // pred_check_branch
        %262 = sbr.rel (%p260) target = $region32
      $region31: #{tpu_custom_call.1} parent=27 // pred_region
        _
      $region32: #{tpu_custom_call.1} parent=27 // pred_fallthru
        _
    $region28: #{tpu_custom_call.1} parent=5 // pred_fallthru
      _
    %p263 = scmp.le.s32.totalorder 2, %s8
    // Predicated region
    $region33: #{tpu_custom_call.1} parent=5 // pred_check
      %p264 = pneg %p263
    $region34: #{tpu_custom_call.1} parent=5 // pred_check_branch
      %266 = sbr.rel (%p264) target = $region36
    $region35: #{tpu_custom_call.1} parent=5 // pred_region
      %s267 = ssub.s32 %s8, 2
      // Predicated region
      $region37: #{tpu_custom_call.1} parent=35 // pred_check
        %p268 = pneg %p105
      $region38: #{tpu_custom_call.1} parent=35 // pred_check_branch
        %270 = sbr.rel (%p268) target = $region40
      $region39: #{tpu_custom_call.1} parent=35 // pred_region
        %p271 = scmp.lt.s32.totalorder %s19, 1
        %s272 = scalar_select %p271, %s19, 1
        %p273 = scmp.lt.s32.totalorder %s20, 0
        %s274 = scalar_select %p273, %s20, 0
        %s275 = smul.addr %s272, 2
        %s276 = sadd.s32 %s274, %s275
        %s277 = smul.addr %s276, 8
        %s278 = scalar_lea.vmem %s2, %s277
      $region40: #{tpu_custom_call.1} parent=35 // pred_fallthru
        _
    $region36: #{tpu_custom_call.1} parent=5 // pred_fallthru
      _
  $region6: #{tpu_custom_call.1} parent=0 // loop_footer
    %s12 = sadd.s32 1, %s8
  $region7: #{tpu_custom_call.1} parent=0 // loop_footer_branch
    %7 = sbr.rel target = $region3
  $region8: #{tpu_custom_call.1} parent=0 // loop_exit
    _

</llo_original>
